<compile_context>
chip_gen: v7x
topology: tpu7x:2x2x1
jax: 0.10.0
libtpu: 0.0.40
codegen_flags: <defaults>
</compile_context>

<pallas_src>
import functools

import jax
import jax.numpy as jnp
from jax.experimental import pallas as pl
from jax.experimental.pallas import tpu as pltpu


# ---------------------------------------------------------------------------
# Pallas kernel: out = [relu](W @ (sum of inputs) + b) on a (C_out, TILE) tile
# ---------------------------------------------------------------------------
def _pw_conv_kernel(*refs, n_in, relu):
    x_refs = refs[:n_in]
    w_ref, b_ref, o_ref = refs[n_in:]
    x = x_refs[0][0]                                   # (C_in, T)
    for r in x_refs[1:]:                               # fused branch sum (VALU slack)
        x = x + r[0]
    y = jnp.dot(w_ref[...], x, preferred_element_type=jnp.float32)
    y = y + b_ref[...]                                 # lane-dense elementwise add
    if relu:
        y = jnp.maximum(y, 0.0)
    o_ref[0] = y.astype(o_ref.dtype)                   # contiguous lane-dense store


def _choose_tile(hw, c_in_total, c_out, batch, itemsize,
                 budget_bytes=12 * 1024 * 1024):
    """Tile (multiple of 128 lanes) such that
    (a) the grid has >= ~4 total steps (pipelining depth / feeds both v7x TCs),
    (b) the double-buffered f32-equivalent working set stays under `budget_bytes`
        (safe for v5e/v6e 128 MiB and v7x 64 MiB VMEM)."""
    chunks = pl.cdiv(hw, 128)                              # HW in 128-lane chunks
    per_col = 2 * ((c_in_total + c_out) * itemsize + c_out * 4)   # double-buffered
    cap = max(1, (budget_bytes // per_col) // 128)
    want_nt = max(1, pl.cdiv(4, max(1, batch)))            # >= ~4 total grid steps
    tile_chunks = max(1, min(chunks, cap, pl.cdiv(chunks, want_nt)))
    return int(tile_chunks) * 128


def _pointwise_conv(xs, w_eff, b_eff, *, relu):
    """out = [relu](W_eff @ sum(xs) + b_eff) over NCHW inputs (1x1 pointwise)."""
    B, C_in, H, W = xs[0].shape
    C_out = int(w_eff.shape[0])
    HW = H * W
    n_in = len(xs)
    dt = xs[0].dtype
    itemsize = jnp.dtype(dt).itemsize

    tile = _choose_tile(HW, n_in * C_in, C_out, B, itemsize)
    n_t = pl.cdiv(HW, tile)                                # partial tail block is masked

    flats = [x.reshape(B, C_in, HW) for x in xs]           # metadata-only reshape
    w = w_eff.astype(dt)                                   # bf16 weights on bf16 path
    b = jnp.broadcast_to(b_eff.astype(jnp.float32).reshape(C_out, 1), (C_out, tile))

    kernel = functools.partial(_pw_conv_kernel, n_in=n_in, relu=relu)

    in_specs = [pl.BlockSpec((1, C_in, tile), lambda bi, ti: (bi, 0, ti))
                for _ in range(n_in)]
    in_specs += [
        pl.BlockSpec((C_out, C_in), lambda bi, ti: (0, 0)),   # tiny weight, stays resident
        pl.BlockSpec((C_out, tile), lambda bi, ti: (0, 0)),   # lane-dense bias, DMA'd once
    ]

    out = pl.pallas_call(
        kernel,
        out_shape=jax.ShapeDtypeStruct((B, C_out, HW), dt),
        grid_spec=pltpu.PrefetchScalarGridSpec(
            num_scalar_prefetch=0,
            grid=(B, n_t),
            in_specs=in_specs,
            out_specs=pl.BlockSpec((1, C_out, tile), lambda bi, ti: (bi, 0, ti)),
        ),
        compiler_params=pltpu.CompilerParams(
            dimension_semantics=("parallel", "parallel"),
            vmem_limit_bytes=32 * 1024 * 1024,
        ),
    )(*flats, w, b)

    return out.reshape(B, C_out, H, W)


# ---------------------------------------------------------------------------
# Static parameter folding (wrapper side, once per layer)
# ---------------------------------------------------------------------------
def _gsconv_effective_params(p):
    """Fold GSConv (1x1 conv -> depthwise 1x1 -> concat -> channel shuffle)
    into a single affine pointwise conv: W_eff (2*C_, C_in), b_eff (2*C_,)."""
    w1, b1, w2, b2 = p["w1"], p["b1"], p["w2"], p["b2"]
    c_, c1 = w1.shape[0], w1.shape[1]
    w1 = w1.reshape(c_, c1)
    b1 = b1.reshape(c_)
    w2 = w2.reshape(c_)
    b2 = b2.reshape(c_)
    n = 2 * c_
    dst = jnp.arange(n)
    # channel shuffle: out[d] = x2[2*d] if d < c_ else x2[2*(d-c_)+1]
    src = jnp.where(dst < c_, 2 * dst, 2 * (dst - c_) + 1)
    is_x3 = src >= c_
    chan = jnp.where(is_x3, src - c_, src)              # source channel of x1
    alpha = jnp.where(is_x3, w2[chan], 1.0)             # depthwise scale (1 for x1 rows)
    beta = jnp.where(is_x3, b2[chan], 0.0)              # depthwise bias  (0 for x1 rows)
    w_eff = alpha[:, None] * w1[chan]
    b_eff = alpha * b1[chan] + beta
    return w_eff, b_eff


def _fold_bn(w_eff, b_eff, bn, eps=1e-5):
    s = bn["gamma"] / jnp.sqrt(bn["var"] + eps)
    return s[:, None] * w_eff, s * b_eff + bn["beta"] - s * bn["mean"]


def _block_effective_params(blk, eps=1e-5):
    """Compose gsc1∘gsc2 (both affine, no nonlinearity between) and fold the
    trailing inference BatchNorm into ONE (C_out, C_in) weight + bias."""
    w1, b1 = _gsconv_effective_params(blk["gsc1"])
    w2, b2 = _gsconv_effective_params(blk["gsc2"])
    w = w2 @ w1
    b = w2 @ b1 + b2
    return _fold_bn(w, b, blk["bn"], eps)


# ---------------------------------------------------------------------------
# FUnit forward built from the fused kernel (4 pallas_calls total)
# ---------------------------------------------------------------------------
def gsconv_block(xs, blk, stride=1):
    """GSConvBlock + BatchNorm + ReLU as a single fused pointwise conv.
    xs: identically shaped NCHW inputs, summed inside the kernel.
    stride: combined s1*s2 subsample (k=1 strided conv == subsample)."""
    if stride > 1:
        xs = [x[:, :, ::stride, ::stride] for x in xs]
    w, b = _block_effective_params(blk)
    return _pointwise_conv(xs, w, b, relu=True)


def funit_forward(x1, x2, x3, params, s=(2, 2, 2, 1, 1, 1), compute_dtype=None):
    if compute_dtype is not None:
        x1, x2, x3 = (x.astype(compute_dtype) for x in (x1, x2, x3))
    y1 = gsconv_block([x1], params["GSBFF"], stride=s[0] * s[1])
    y2 = gsconv_block([x2], params["GSBFD"], stride=s[2] * s[3])
    y3 = gsconv_block([x3], params["GSBCE"], stride=s[4] * s[5])
    # y1 + y2 + y3 fused into GSBFC's conv (3 input refs summed in-kernel)
    return gsconv_block([y1, y2, y3], params["GSBFC"], stride=1)


# ---------------------------------------------------------------------------
# Plain-JAX reference mirroring the PyTorch forward (inference-mode BN)
# ---------------------------------------------------------------------------
def _gsconv_ref(x, p, stride=1):
    w1, b1, w2, b2 = p["w1"], p["b1"], p["w2"], p["b2"]
    c_ = w1.shape[0]
    if stride > 1:
        x = x[:, :, ::stride, ::stride]
    x1 = jnp.einsum("oc,bchw->bohw", w1.reshape(c_, -1), x) + b1.reshape(1, c_, 1, 1)
    x3 = w2.reshape(1, c_, 1, 1) * x1 + b2.reshape(1, c_, 1, 1)
    x2 = jnp.concatenate([x1, x3], axis=1)
    b, n, h, w = x2.shape
    y = x2.reshape(b * n // 2, 2, h * w).transpose(1, 0, 2).reshape(2, b, n // 2, h, w)
    return jnp.concatenate([y[0], y[1]], axis=1)


def _bn_relu_ref(x, bn, eps=1e-5):
    s = bn["gamma"] / jnp.sqrt(bn["var"] + eps)
    y = (x - bn["mean"].reshape(1, -1, 1, 1)) * s.reshape(1, -1, 1, 1) \
        + bn["beta"].reshape(1, -1, 1, 1)
    return jnp.maximum(y, 0.0)


def _gsconv_block_ref(x, blk, s1=1, s2=1):
    h = _gsconv_ref(x, blk["gsc1"], s1)
    h = _gsconv_ref(h, blk["gsc2"], s2)
    return _bn_relu_ref(h, blk["bn"])


def funit_ref(x1, x2, x3, params, s=(2, 2, 2, 1, 1, 1)):
    y1 = _gsconv_block_ref(x1, params["GSBFF"], s[0], s[1])
    y2 = _gsconv_block_ref(x2, params["GSBFD"], s[2], s[3])
    y3 = _gsconv_block_ref(x3, params["GSBCE"], s[4], s[5])
    return _gsconv_block_ref(y1 + y2 + y3, params["GSBFC"], 1, 1)


# ---------------------------------------------------------------------------
# Deterministic synthetic parameters with the nn.Module's shapes
# ---------------------------------------------------------------------------
def _make_gsconv_params(key, c_in, c_out):
    c_ = c_out // 2
    k1, k2, k3, k4 = jax.random.split(key, 4)
    return {
        "w1": jax.random.normal(k1, (c_, c_in, 1, 1), jnp.float32) * 0.5,
        "b1": jax.random.normal(k2, (c_,), jnp.float32) * 0.1,
        "w2": jax.random.normal(k3, (c_, 1, 1, 1), jnp.float32) * 0.5,
        "b2": jax.random.normal(k4, (c_,), jnp.float32) * 0.1,
    }


def _make_bn_params(key, c):
    k1, k2, k3, k4 = jax.random.split(key, 4)
    return {
        "gamma": jax.random.normal(k1, (c,), jnp.float32) * 0.2 + 1.0,
        "beta": jax.random.normal(k2, (c,), jnp.float32) * 0.1,
        "mean": jax.random.normal(k3, (c,), jnp.float32) * 0.1,
        "var": jax.random.uniform(k4, (c,), jnp.float32, 0.5, 1.5),
    }


def _make_block_params(key, c_in, c_out):
    k1, k2, k3 = jax.random.split(key, 3)
    return {
        "gsc1": _make_gsconv_params(k1, c_in, c_out),
        "gsc2": _make_gsconv_params(k2, c_out, c_out),
        "bn": _make_bn_params(k3, c_out),
    }


if __name__ == "__main__":
    key = jax.random.PRNGKey(0)
    B = 2
    in_ch1, in_ch2, in_ch3, out_ch = 4, 6, 8, 8
    H3, W3 = 16, 16                       # x3 spatial; x2 is 2x, x1 is 4x (strides 2,2,2,1,1,1)
    s = (2, 2, 2, 1, 1, 1)

    keys = jax.random.split(key, 7)
    x1 = jax.random.normal(keys[0], (B, in_ch1, 4 * H3, 4 * W3), jnp.float32)
    x2 = jax.random.normal(keys[1], (B, in_ch2, 2 * H3, 2 * W3), jnp.float32)
    x3 = jax.random.normal(keys[2], (B, in_ch3, H3, W3), jnp.float32)

    params = {
        "GSBFF": _make_block_params(keys[3], in_ch1, in_ch3),
        "GSBFD": _make_block_params(keys[4], in_ch2, in_ch3),
        "GSBCE": _make_block_params(keys[5], in_ch3, in_ch3),
        "GSBFC": _make_block_params(keys[6], in_ch3, out_ch),
    }

    ref = funit_ref(x1, x2, x3, params, s)

    # f32 path: must match the PyTorch-equivalent reference closely.
    out = jax.block_until_ready(funit_forward(x1, x2, x3, params, s))
    assert out.shape == (B, out_ch, H3, W3), out.shape
    assert jnp.allclose(out, ref, atol=2e-3, rtol=2e-3), (
        "f32 mismatch vs reference, max abs diff = %g"
        % float(jnp.max(jnp.abs(out - ref))))

    # bf16 activation/weight path (halves HBM traffic): loose sanity check only.
    out_bf = jax.block_until_ready(
        funit_forward(x1, x2, x3, params, s, compute_dtype=jnp.bfloat16))
    assert out_bf.shape == (B, out_ch, H3, W3), out_bf.shape
    diff = float(jnp.max(jnp.abs(out_bf.astype(jnp.float32) - ref)))
    scale = float(jnp.max(jnp.abs(ref)))
    assert diff <= 0.1 * scale + 0.2, "bf16 sanity check failed, max diff = %g" % diff

    print("KERNEL_OK")
</pallas_src>

<mosaic_0001>
module attributes {stable_mosaic.version = 11 : i64} {
  func.func @_pw_conv_kernel(%arg0: i32, %arg1: i32, %arg2: memref<1x4x128xf32, #tpu.memory_space<vmem>>, %arg3: memref<8x4xf32, #tpu.memory_space<vmem>>, %arg4: memref<8x128xf32, #tpu.memory_space<vmem>>, %arg5: memref<1x8x128xf32, #tpu.memory_space<vmem>>) attributes {dimension_semantics = [#tpu.dimension_semantics<parallel>, #tpu.dimension_semantics<parallel>], iteration_bounds = array<i64: 2, 2>, scalar_prefetch = 0 : i64, scratch_operands = 0 : i64, tpu.core_type = #tpu.core_type<tc>, window_params = [{transform_indices = @transform_0, window_bounds = array<i64: 1, 4, 128>}, {pipeline_mode = #tpu.pipeline_mode<synchronous>, transform_indices = @transform_1, window_bounds = array<i64: 8, 4>}, {pipeline_mode = #tpu.pipeline_mode<synchronous>, transform_indices = @transform_2, window_bounds = array<i64: 8, 128>}, {transform_indices = @transform_3, window_bounds = array<i64: 1, 8, 128>}]} {
    %c0 = arith.constant 0 : index
    %c0_0 = arith.constant 0 : index
    %c0_1 = arith.constant 0 : index
    %0 = vector.load %arg2[%c0, %c0_0, %c0_1] : memref<1x4x128xf32, #tpu.memory_space<vmem>>, vector<1x4x128xf32>
    %1 = vector.shape_cast %0 : vector<1x4x128xf32> to vector<4x128xf32>
    %c0_2 = arith.constant 0 : index
    %c0_3 = arith.constant 0 : index
    %2 = vector.load %arg3[%c0_2, %c0_3] : memref<8x4xf32, #tpu.memory_space<vmem>>, vector<8x4xf32>
    %cst = arith.constant dense<0.000000e+00> : vector<8x128xf32>
    %3 = tpu.matmul %2, %1, %cst {dimension_numbers = #tpu.dot_dimension_numbers<[1], [0], [0], [1], [0, 0, 1, 1], [], []>} : vector<8x4xf32>, vector<4x128xf32>, vector<8x128xf32> -> vector<8x128xf32>
    %c0_4 = arith.constant 0 : index
    %c0_5 = arith.constant 0 : index
    %4 = vector.load %arg4[%c0_4, %c0_5] : memref<8x128xf32, #tpu.memory_space<vmem>>, vector<8x128xf32>
    %5 = arith.addf %3, %4 : vector<8x128xf32>
    %cst_6 = arith.constant 0.000000e+00 : f32
    %6 = vector.broadcast %cst_6 : f32 to vector<8x128xf32>
    %7 = arith.maximumf %5, %6 : vector<8x128xf32>
    %c0_7 = arith.constant 0 : index
    %c0_8 = arith.constant 0 : index
    %c0_9 = arith.constant 0 : index
    %8 = vector.load %arg5[%c0_7, %c0_8, %c0_9] : memref<1x8x128xf32, #tpu.memory_space<vmem>>, vector<1x8x128xf32>
    %9 = vector.shape_cast %8 : vector<1x8x128xf32> to vector<8x128xf32>
    %10 = vector.shape_cast %7 : vector<8x128xf32> to vector<1x8x128xf32>
    tpu.vector_store %arg5[%c0_7, %c0_8, %c0_9], %10 {strides = array<i32>} : memref<1x8x128xf32, #tpu.memory_space<vmem>>, vector<1x8x128xf32>,
    return
  }
  func.func @transform_0(%arg0: i32, %arg1: i32) -> (i32, i32, i32) {
    %c0_i32 = arith.constant 0 : i32
    %c0_i32_0 = arith.constant 0 : i32
    return %arg0, %c0_i32, %arg1 : i32, i32, i32
  }
  func.func @transform_1(%arg0: i32, %arg1: i32) -> (i32, i32) {
    %c0_i32 = arith.constant 0 : i32
    %c0_i32_0 = arith.constant 0 : i32
    %c0_i32_1 = arith.constant 0 : i32
    return %c0_i32, %c0_i32_0 : i32, i32
  }
  func.func @transform_2(%arg0: i32, %arg1: i32) -> (i32, i32) {
    %c0_i32 = arith.constant 0 : i32
    %c0_i32_0 = arith.constant 0 : i32
    %c0_i32_1 = arith.constant 0 : i32
    return %c0_i32, %c0_i32_0 : i32, i32
  }
  func.func @transform_3(%arg0: i32, %arg1: i32) -> (i32, i32, i32) {
    %c0_i32 = arith.constant 0 : i32
    %c0_i32_0 = arith.constant 0 : i32
    return %arg0, %c0_i32, %arg1 : i32, i32, i32
  }
}

</mosaic_0001>

<llo_original>
// kernel: tpu_custom_call.1
$region0: #{tpu_custom_call.1}
  #allocation0 [shape = 'u32[]', space=smem, size = 0x4, offset = 0x4, fixed_abs, tag = 'smem constant byte address 0x4 - core index']
  #allocation1 [shape = 'u32[144,128]{1,0:T(1,128)}', space=vmem, size = 0x12000, scoped, tag = 'internal scratch']
  %s0 = inlined_call_operand.hbm [shape: f32[2,4,256], index: 0, kind: input, shape index: {}]
  %s1 = inlined_call_operand.vmem [shape: f32[8,4], index: 1, kind: input, shape index: {}]
  %s2 = inlined_call_operand.vmem [shape: f32[8,128], index: 2, kind: input, shape index: {}]
  %s3 = inlined_call_operand.hbm [shape: f32[2,8,256], index: 3, kind: output, shape index: {}]
  %s4 = sld [smem:[#allocation0]]
  $region49: #{tpu_custom_call.1} parent=0
    _
  %s6 = ssub.s32 1, %s4
  %s7 = scalar_select 0, %s6, %s4
  $region1: #{tpu_custom_call.1} parent=0
    #allocation2 [shape = 'u8[4096]{0}', space=vmem, size = 0x1000, scoped, tag = 'input window, operand 0']
    #allocation3 [shape = 's32[2]{0}', space=sflag, size = 0x8, scoped, tag = 'scoped memory for tpu_custom_call.1']
    #allocation4 [shape = 's32[2]{0}', space=sflag, size = 0x8, scoped, tag = 'scoped memory for tpu_custom_call.1']
    #allocation5 [shape = 'u8[8192]{0}', space=vmem, size = 0x2000, scoped, tag = 'output window, operand 0']
    %8 = vsyncpa [#allocation3], 0
    %s9 = scalar_lea.sflag [#allocation3], 1
    %10 = vsyncpa %s9, 0
    %11 = vsyncpa [#allocation4], 0
    %s12 = scalar_lea.sflag [#allocation4], 1
    %13 = vsyncpa %s12, 0
    loop: start=0, step=1, limit=6
    $region2: #{tpu_custom_call.1} parent=1 // loop_pre_header
      _
    $region3: #{tpu_custom_call.1} parent=1 // loop_header
      %s15 = sphi 0, %s19
      %p16 = scmp.ge.s32.totalorder %s15, 6
      %s22 = sphi 0, %s34
      %s23 = sphi 0, %s30
      %s24 = sphi 0, %s22
      %s25 = sphi 0, %s23
      %s26 = sphi 0, %s24
      %s27 = sphi 0, %s25
      %s39 = sphi 0, %s41
      %s42 = sphi 0, %s39
      %s43 = sphi 0, %s42
      %s59 = sphi 0, %s43
      %s63 = sphi 0, %s63
      %s65 = sphi 0, %s63
      %s66 = sphi 0, %s65
      %s80 = sphi 0, %s66
      %s84 = sphi 0, %s84
      %s86 = sphi 0, %s84
      %s87 = sphi 0, %s86
      %s101 = sphi 0, %s87
      %s109 = sphi 0, %s111
      %s112 = sphi 0, %s109
      %s113 = sphi 0, %s112
      %s129 = sphi 0, %s113
    $region4: #{tpu_custom_call.1} parent=1 // loop_header_branch
      %18 = sbr.rel (%p16) target = $region8
    $region5: #{tpu_custom_call.1} parent=1 // loop_body
      %s20 = ssub.s32 %s15, 1
      %s21 = ssub.s32 %s15, 2
      %s28 = sadd.s32 1, %s23
      %p29 = scmp.ge.s32.totalorder %s28, 2
      %s30 = scalar_select %p29, 0, %s28
      %s31 = sadd.s32 1, %s22
      %s32 = scalar_select %p29, %s31, %s22
      %p33 = scmp.ge.s32.totalorder %s32, 2
      %s34 = scalar_select %p33, 0, %s32
      %s35 = ssub.s32 %s22, %s34
      %s36 = ssub.s32 %s23, %s30
      %s37 = sor.u32 %s35, %s36
      %p38 = scmp.eq.s32.totalorder %s37, 0
      %s40 = sadd.s32 %s39, 1
      %s41 = scalar_select %p38, %s39, %s40
      %p44 = pneg %p38
      %p45 = scmp.eq.s32.totalorder %s15, 3
      %p46 = por %p44, %p45
      %p47 = scmp.ne.s32.totalorder %s39, %s42
      %p48 = scmp.eq.s32.totalorder %s15, 0
      %p49 = por %p47, %p48
      %p50 = scmp.ne.s32.totalorder %s39, %s42
      %p51 = scmp.eq.s32.totalorder %s20, 3
      %p52 = por %p50, %p51
      %p53 = scmp.ne.s32.totalorder %s42, %s43
      %p54 = scmp.eq.s32.totalorder %s20, 0
      %p55 = por %p53, %p54
      %p56 = scmp.ne.s32.totalorder %s42, %s43
      %p57 = scmp.eq.s32.totalorder %s21, 3
      %p58 = por %p56, %p57
      %p60 = scmp.ne.s32.totalorder %s43, %s59
      %p61 = scmp.eq.s32.totalorder %s21, 0
      %p62 = por %p60, %p61
      %s64 = sadd.s32 %s63, 1
      %p67 = scmp.eq.s32.totalorder %s15, 3
      %p68 = scmp.ne.s32.totalorder %s63, %s65
      %p69 = scmp.eq.s32.totalorder %s15, 0
      %p70 = por %p68, %p69
      %p71 = scmp.ne.s32.totalorder %s63, %s65
      %p72 = scmp.eq.s32.totalorder %s20, 3
      %p73 = por %p71, %p72
      %p74 = scmp.ne.s32.totalorder %s65, %s66
      %p75 = scmp.eq.s32.totalorder %s20, 0
      %p76 = por %p74, %p75
      %p77 = scmp.ne.s32.totalorder %s65, %s66
      %p78 = scmp.eq.s32.totalorder %s21, 3
      %p79 = por %p77, %p78
      %p81 = scmp.ne.s32.totalorder %s66, %s80
      %p82 = scmp.eq.s32.totalorder %s21, 0
      %p83 = por %p81, %p82
      %s85 = sadd.s32 %s84, 1
      %p88 = scmp.eq.s32.totalorder %s15, 3
      %p89 = scmp.ne.s32.totalorder %s84, %s86
      %p90 = scmp.eq.s32.totalorder %s15, 0
      %p91 = por %p89, %p90
      %p92 = scmp.ne.s32.totalorder %s84, %s86
      %p93 = scmp.eq.s32.totalorder %s20, 3
      %p94 = por %p92, %p93
      %p95 = scmp.ne.s32.totalorder %s86, %s87
      %p96 = scmp.eq.s32.totalorder %s20, 0
      %p97 = por %p95, %p96
      %p98 = scmp.ne.s32.totalorder %s86, %s87
      %p99 = scmp.eq.s32.totalorder %s21, 3
      %p100 = por %p98, %p99
      %p102 = scmp.ne.s32.totalorder %s87, %s101
      %p103 = scmp.eq.s32.totalorder %s21, 0
      %p104 = por %p102, %p103
      %s105 = ssub.s32 %s22, %s34
      %s106 = ssub.s32 %s23, %s30
      %s107 = sor.u32 %s105, %s106
      %p108 = scmp.eq.s32.totalorder %s107, 0
      %s110 = sadd.s32 %s109, 1
      %s111 = scalar_select %p108, %s109, %s110
      %p114 = pneg %p108
      %p115 = scmp.eq.s32.totalorder %s15, 3
      %p116 = por %p114, %p115
      %p117 = scmp.ne.s32.totalorder %s109, %s112
      %p118 = scmp.eq.s32.totalorder %s15, 0
      %p119 = por %p117, %p118
      %p120 = scmp.ne.s32.totalorder %s109, %s112
      %p121 = scmp.eq.s32.totalorder %s20, 3
      %p122 = por %p120, %p121
      %p123 = scmp.ne.s32.totalorder %s112, %s113
      %p124 = scmp.eq.s32.totalorder %s20, 0
      %p125 = por %p123, %p124
      %p126 = scmp.ne.s32.totalorder %s112, %s113
      %p127 = scmp.eq.s32.totalorder %s21, 3
      %p128 = por %p126, %p127
      %p130 = scmp.ne.s32.totalorder %s113, %s129
      %p131 = scmp.eq.s32.totalorder %s21, 0
      %p132 = por %p130, %p131
      %p133 = scmp.le.s32.totalorder 1, %s15
      %p134 = scmp.lt.s32.totalorder %s15, 5
      %p135 = pnand %p133, %p134
      %p136 = pneg %p135
      // Predicated region
      $region9: #{tpu_custom_call.1} parent=5 // pred_check
        _
      $region10: #{tpu_custom_call.1} parent=5 // pred_check_branch
        %138 = sbr.rel (%p135) target = $region12
      $region11: #{tpu_custom_call.1} parent=5 // pred_region
        %s139 = ssub.s32 %s15, 1
        // Predicated region
        $region13: #{tpu_custom_call.1} parent=11 // pred_check
          %p140 = pneg %p76
        $region14: #{tpu_custom_call.1} parent=11 // pred_check_branch
          %142 = sbr.rel (%p140) target = $region16
        $region15: #{tpu_custom_call.1} parent=11 // pred_region
          _
        $region16: #{tpu_custom_call.1} parent=11 // pred_fallthru
          _
        // Predicated region
        $region17: #{tpu_custom_call.1} parent=11 // pred_check
          %p143 = pneg %p97
        $region18: #{tpu_custom_call.1} parent=11 // pred_check_branch
          %145 = sbr.rel (%p143) target = $region20
        $region19: #{tpu_custom_call.1} parent=11 // pred_region
          _
        $region20: #{tpu_custom_call.1} parent=11 // pred_fallthru
          _
      $region12: #{tpu_custom_call.1} parent=5 // pred_fallthru
        _
      %p146 = scmp.lt.s32.totalorder %s15, 4
      // Predicated region
      $region21: #{tpu_custom_call.1} parent=5 // pred_check
        %p147 = pneg %p146
      $region22: #{tpu_custom_call.1} parent=5 // pred_check_branch
        %149 = sbr.rel (%p147) target = $region24
      $region23: #{tpu_custom_call.1} parent=5 // pred_region
        // Predicated region
        $region25: #{tpu_custom_call.1} parent=23 // pred_check
          %p150 = pneg %p49
        $region26: #{tpu_custom_call.1} parent=23 // pred_check_branch
          %152 = sbr.rel (%p150) target = $region28
        $region27: #{tpu_custom_call.1} parent=23 // pred_region
          %s153 = sand.u32 %s39, 1
          %s154 = scalar_lea.sflag [#allocation3], %s153
          %s155 = sand.u32 %s39, 1
          %s156 = smul.addr %s155, 4
          %s157 = scalar_lea.vmem [#allocation2], %s156
          %s159 = ssub.s32 64, 64
          %160 = vsyncadd %s154, %s159
          %s161 = smul.addr %s22, 2
          %s162 = sadd.s32 %s23, %s161
          %s163 = smul.addr %s162, 64
          %s164 = scalar_lea.hbm %s0, %s163
          %s166 = sshll.u32 %s157, 4
          %s167 = int_to_ptr.vmem [resolvable:$true] %s166
          %169 = dma.hbm_to_vmem [thread:$0]  %s164, 64, %s167, %s154
        $region28: #{tpu_custom_call.1} parent=23 // pred_fallthru
          _
      $region24: #{tpu_custom_call.1} parent=5 // pred_fallthru
        _
      %p170 = scmp.le.s32.totalorder 1, %s15
      %p171 = scmp.lt.s32.totalorder %s15, 5
      %p172 = pnand %p170, %p171
      %p173 = pneg %p172
      // Predicated region
      $region29: #{tpu_custom_call.1} parent=5 // pred_check
        _
      $region30: #{tpu_custom_call.1} parent=5 // pred_check_branch
        %175 = sbr.rel (%p172) target = $region32
      $region31: #{tpu_custom_call.1} parent=5 // pred_region
        %s176 = ssub.s32 %s15, 1
        %s177 = sand.u32 %s42, 1
        %s178 = scalar_lea.sflag [#allocation3], %s177
        %s179 = sand.u32 %s42, 1
        %s180 = smul.addr %s179, 4
        %s181 = scalar_lea.vmem [#allocation2], %s180
        // Predicated region
        $region33: #{tpu_custom_call.1} parent=31 // pred_check
          %p182 = pneg %p55
        $region34: #{tpu_custom_call.1} parent=31 // pred_check_branch
          %184 = sbr.rel (%p182) target = $region36
        $region35: #{tpu_custom_call.1} parent=31 // pred_region
          %185 = dma.done %s178, 64
        $region36: #{tpu_custom_call.1} parent=31 // pred_fallthru
          _
        %s186 = sand.u32 %s42, 1
        %s187 = scalar_lea.sflag [#allocation3], %s186
        %s188 = sand.u32 %s42, 1
        %s189 = smul.addr %s188, 4
        %s190 = scalar_lea.vmem [#allocation2], %s189
        %p191 = pneg %p55
        %p192 = pneg %p52
        %p193 = pneg %p76
        %p194 = pneg %p73
        %p195 = pneg %p97
        %p196 = pneg %p94
        %p197 = pneg %p125
        %p198 = pneg %p122
        %s199 = sand.u32 %s112, 1
        %s200 = scalar_lea.sflag [#allocation4], %s199
        %s201 = sand.u32 %s112, 1
        %s202 = smul.addr %s201, 8
        %s203 = scalar_lea.vmem [#allocation5], %s202
        %v204 = vld [vmem:[%s181] sm:$0xf]
        %v205 = vld [vmem:[%s1] sm:$0xff]
        %v206 = vld [vmem:[%s2] sm:$0xff]
        %vm207 = vcmask 31744
        %v209 = vsel %vm207, %v205, 0
        %vm211 = vcmask 1043456
        %v213 = vsel %vm211, %v204, 0
        %215 = vmatprep.subr.mxu0 0.0
        %216 = vmatpush1.msra.mxu0 %v213
        %217 = vmatprep.subr.mxu0 0.0
        %218 = vmatpush1.msra.mxu0 0.0
        %219 = vmatprep.subr.mxu0 0.0
        %220 = vmatpush1.msra.mxu0 0.0
        %221 = vmatprep.subr.mxu0 0.0
        %222 = vmatpush1.msra.mxu0 0.0
        %223 = vmatprep.subr.mxu0 0.0
        %224 = vmatpush1.msra.mxu0 0.0
        %225 = vmatprep.subr.mxu0 0.0
        %226 = vmatpush1.msra.mxu0 0.0
        %227 = vmatprep.subr.mxu0 0.0
        %228 = vmatpush1.msra.mxu0 0.0
        %229 = vmatprep.subr.mxu0 0.0
        %230 = vmatpush1.msra.mxu0 0.0
        %231 = vmatprep.subr.mxu0 0.0
        %232 = vmatpush1.msra.mxu0 0.0
        %233 = vmatprep.subr.mxu0 0.0
        %234 = vmatpush1.msra.mxu0 0.0
        %235 = vmatprep.subr.mxu0 0.0
        %236 = vmatpush1.msra.mxu0 0.0
        %237 = vmatprep.subr.mxu0 0.0
        %238 = vmatpush1.msra.mxu0 0.0
        %239 = vmatprep.subr.mxu0 0.0
        %240 = vmatpush1.msra.mxu0 0.0
        %241 = vmatprep.subr.mxu0 0.0
        %242 = vmatpush1.msra.mxu0 0.0
        %243 = vmatprep.subr.mxu0 0.0
        %244 = vmatpush1.msra.mxu0 0.0
        %245 = vmatprep.subr.mxu0 0.0
        %246 = vmatpush1.msra.mxu0 0.0
        %247 = vmatprep.subr.mxu0 0.0
        %248 = vmatpush1.msra.mxu0 0.0
        %249 = vmatprep.subr.mxu0 0.0
        %250 = vmatpush1.msra.mxu0 0.0
        %251 = vmatprep.subr.mxu0 0.0
        %252 = vmatpush1.msra.mxu0 0.0
        %253 = vmatprep.subr.mxu0 0.0
        %254 = vmatpush1.msra.mxu0 0.0
        %255 = vmatprep.subr.mxu0 0.0
        %256 = vmatpush1.msra.mxu0 0.0
        %257 = vmatprep.subr.mxu0 0.0
        %258 = vmatpush1.msra.mxu0 0.0
        %259 = vmatprep.subr.mxu0 0.0
        %260 = vmatpush1.msra.mxu0 0.0
        %261 = vmatprep.subr.mxu0 0.0
        %262 = vmatpush1.msra.mxu0 0.0
        %263 = vmatprep.subr.mxu0 0.0
        %264 = vmatpush1.msra.mxu0 0.0
        %265 = vmatprep.subr.mxu0 0.0
        %266 = vmatpush1.msra.mxu0 0.0
        %267 = vmatprep.subr.mxu0 0.0
        %268 = vmatpush1.msra.mxu0 0.0
        %269 = vmatprep.subr.mxu0 0.0
        %270 = vmatpush1.msra.mxu0 0.0
        %271 = vmatprep.subr.mxu0 0.0
        %272 = vmatpush1.msra.mxu0 0.0
        %273 = vmatprep.subr.mxu0 0.0
        %274 = vmatpush1.msra.mxu0 0.0
        %275 = vmatprep.subr.mxu0 0.0
        %276 = vmatpush1.msra.mxu0 0.0
        %277 = vmatprep.subr.mxu0 0.0
        %278 = vmatpush1.msra.mxu0 0.0
        %279 = vmatprep.mubr.f32.mxu0 0.0
        %280 = vmatmul.mubr.f32.gmra.mrb[0].mxu0 %v209
        %v281 = vpop.f32.mrb[0].mxu0
        %v282 = vadd.f32 %v206, %v281
        %v283 = vpop.f32.mrb[0].mxu0
        %284 = vdwg.mxu0
        %v285 = vmax.f32 %v282, 0.0
        %286 = vst [vmem:[%s203] sm:$0xff] %v285
        %s287 = sand.u32 %s112, 1
        %s288 = scalar_lea.sflag [#allocation4], %s287
        %s289 = sand.u32 %s112, 1
        %s290 = smul.addr %s289, 8
        %s291 = scalar_lea.vmem [#allocation5], %s290
        // Predicated region
        $region37: #{tpu_custom_call.1} parent=31 // pred_check
          %p292 = pneg %p122
        $region38: #{tpu_custom_call.1} parent=31 // pred_check_branch
          %294 = sbr.rel (%p292) target = $region40
        $region39: #{tpu_custom_call.1} parent=31 // pred_region
          %s296 = ssub.s32 128, 128
          %297 = vsyncadd %s288, %s296
          %s298 = smul.addr %s24, 2
          %s299 = sadd.s32 %s25, %s298
          %s300 = smul.addr %s299, 128
          %s301 = scalar_lea.hbm %s3, %s300
          %s303 = sshll.u32 %s291, 4
          %s304 = int_to_ptr.vmem [resolvable:$true] %s303
          %306 = dma.vmem_to_hbm [thread:$0]  %s304, 128, %s301, %s288
        $region40: #{tpu_custom_call.1} parent=31 // pred_fallthru
          _
      $region32: #{tpu_custom_call.1} parent=5 // pred_fallthru
        _
      %p307 = scmp.le.s32.totalorder 2, %s15
      // Predicated region
      $region41: #{tpu_custom_call.1} parent=5 // pred_check
        %p308 = pneg %p307
      $region42: #{tpu_custom_call.1} parent=5 // pred_check_branch
        %310 = sbr.rel (%p308) target = $region44
      $region43: #{tpu_custom_call.1} parent=5 // pred_region
        %s311 = ssub.s32 %s15, 2
        // Predicated region
        $region45: #{tpu_custom_call.1} parent=43 // pred_check
          %p312 = pneg %p128
        $region46: #{tpu_custom_call.1} parent=43 // pred_check_branch
          %314 = sbr.rel (%p312) target = $region48
        $region47: #{tpu_custom_call.1} parent=43 // pred_region
          %s315 = sand.u32 %s113, 1
          %s316 = scalar_lea.sflag [#allocation4], %s315
          %s317 = sand.u32 %s113, 1
          %s318 = smul.addr %s317, 8
          %s319 = scalar_lea.vmem [#allocation5], %s318
          %320 = dma.done %s316, 128
        $region48: #{tpu_custom_call.1} parent=43 // pred_fallthru
          _
      $region44: #{tpu_custom_call.1} parent=5 // pred_fallthru
        _
    $region6: #{tpu_custom_call.1} parent=1 // loop_footer
      %s19 = sadd.s32 1, %s15
    $region7: #{tpu_custom_call.1} parent=1 // loop_footer_branch
      %14 = sbr.rel target = $region3
    $region8: #{tpu_custom_call.1} parent=1 // loop_exit
      _
    %321 = vsyncpa [#allocation3], 1
    %s322 = scalar_lea.sflag [#allocation3], 1
    %323 = vsyncpa %s322, 1
    %324 = vsyncpa [#allocation4], 1
    %s325 = scalar_lea.sflag [#allocation4], 1
    %326 = vsyncpa %s325, 1

</llo_original>
